<compile_context>
chip_gen: v6e
topology: v6e:2x2x1
jax: 0.10.0
libtpu: 0.0.40
codegen_flags: <defaults>
</compile_context>

<pallas_src>
import functools
import math

import jax
import jax.numpy as jnp
from jax.experimental import pallas as pl
from jax.experimental.pallas import tpu as pltpu


# ----------------------------------------------------------------------------- config
CONFIG = dict(
    sample_size=32,                       # TODO(synk): original 64
    in_channels=3,
    out_channels=3,
    layers_per_block=2,
    block_out_channels=(8, 16, 16, 32, 32, 64),   # TODO(synk): original (128,256,256,512,512,1024)
    down_block_types=("DownBlock2D", "DownBlock2D", "DownBlock2D",
                      "DownBlock2D", "AttnDownBlock2D", "AttnDownBlock2D"),
    up_block_types=("AttnUpBlock2D", "AttnUpBlock2D", "UpBlock2D",
                    "UpBlock2D", "UpBlock2D", "UpBlock2D"),
    norm_num_groups=4,                    # TODO(synk): original 32
    norm_eps=1e-5,
    attention_head_dim=8,
    num_class=24,
)

# Explicit scoped-VMEM cap (default is 16 MiB on v5e / 32 MiB on v6e,v7x).
# TODO(synk): re-derive per-tile for the real 64x64 config (and against v7x's 64 MiB physical).
_VMEM_LIMIT_BYTES = 32 * 1024 * 1024


def _round_up(x, m):
    return (x + m - 1) // m * m


def _silu(x):
    return x * jax.nn.sigmoid(x)


# ----------------------------------------------------------------------------- matmul kernel
def _matmul_bias_kernel(a_ref, b_ref, bias_ref, o_ref, acc_ref, *, nk, activation):
    @pl.when(pl.program_id(2) == 0)
    def _init():
        acc_ref[...] = jnp.zeros_like(acc_ref)

    # bf16 MXU operands (cast in the wrapper), f32 accumulation.
    acc_ref[...] += jnp.dot(a_ref[...], b_ref[...], preferred_element_type=jnp.float32)

    @pl.when(pl.program_id(2) == nk - 1)
    def _finalize():
        y = acc_ref[...] + bias_ref[...]          # bias [1, tn] broadcasts over rows
        if activation == "silu":
            y = y * jax.nn.sigmoid(y)
        o_ref[...] = y.astype(o_ref.dtype)


def pallas_matmul(a, b, bias=None, activation=None, out_dtype=jnp.float32,
                  tm=512, tn=256, tk=512):
    """y = act(a @ b + bias).  a: [M, K], b: [K, N], bias: [N] or None.

    Operands are cast/padded to bf16 in the wrapper (halves HBM/VMEM traffic of a/b blocks);
    accumulation is f32.  Used for the small linear layers (time MLP, class embedding,
    per-resnet time projection, fused qkv projection); convs use the direct conv kernel.
    tn/tk defaults target the 256-wide v6e/v7x MXU; tm=512 amortizes grid-step overhead.
    """
    a = a.astype(jnp.bfloat16)
    b = b.astype(jnp.bfloat16)
    M, K = a.shape
    K2, N = b.shape
    assert K == K2
    tm = min(tm, _round_up(M, 8))
    tn = min(tn, _round_up(N, 128))
    tk = min(tk, _round_up(K, 128))
    Mp, Kp, Np = _round_up(M, tm), _round_up(K, tk), _round_up(N, tn)
    if (Mp, Kp) != (M, K):
        a = jnp.pad(a, ((0, Mp - M), (0, Kp - K)))
    if (Kp, Np) != (K, N):
        b = jnp.pad(b, ((0, Kp - K), (0, Np - N)))
    if bias is None:
        bias_p = jnp.zeros((1, Np), jnp.float32)
    else:
        bias_p = bias.astype(jnp.float32).reshape(1, N)
        if Np != N:
            bias_p = jnp.pad(bias_p, ((0, 0), (0, Np - N)))
    grid = (Mp // tm, Np // tn, Kp // tk)
    kernel = functools.partial(_matmul_bias_kernel, nk=grid[2], activation=activation)
    out = pl.pallas_call(
        kernel,
        out_shape=jax.ShapeDtypeStruct((Mp, Np), out_dtype),
        grid_spec=pltpu.PrefetchScalarGridSpec(
            num_scalar_prefetch=0,
            grid=grid,
            in_specs=[
                pl.BlockSpec((tm, tk), lambda i, j, k: (i, k)),
                pl.BlockSpec((tk, tn), lambda i, j, k: (k, j)),
                pl.BlockSpec((1, tn), lambda i, j, k: (0, j)),
            ],
            out_specs=pl.BlockSpec((tm, tn), lambda i, j, k: (i, j)),
            scratch_shapes=[pltpu.VMEM((tm, tn), jnp.float32)],
        ),
        compiler_params=pltpu.CompilerParams(
            dimension_semantics=("parallel", "parallel", "arbitrary"),
            vmem_limit_bytes=_VMEM_LIMIT_BYTES),
    )(a, b, bias_p)
    if (Mp, Np) != (M, N):
        out = out[:M, :N]
    return out


# ----------------------------------------------------------------------------- direct conv kernel
def _conv_nhwc_kernel(*refs, n_in, has_temb, has_res, Ho, Wo, W_acc, use_roll):
    """Direct conv: sum over (input, tap) of shifted-row-slab matmuls; fused bias/temb/residual.

    refs = x_refs[n_in] (bf16, padded NHWC, width padded to W_acc), w_refs[n_in]
           (bf16 [kh,kw,Cin,Cout]), bias (1,Cout), [temb (1,1,Cout)], [res (1,Ho,Wo,Cout)],
           out (1,Ho,Wo,Cout), acc scratch (Ho*W_acc or Ho*Wo, Cout) f32.

    use_roll=True: per ky one contiguous row slab is loaded, the tap matmul runs at padded
    width and the kx shift is an XLU sublane roll of the partial; acc is sliced once in the
    epilogue.  use_roll=False: proven fallback that slices a window per tap.
    """
    acc_ref = refs[-1]
    o_ref = refs[-2]
    x_refs = refs[:n_in]
    w_refs = refs[n_in:2 * n_in]
    rest = refs[2 * n_in:-2]
    bias_ref = rest[0]
    pos = 1
    temb_ref = None
    if has_temb:
        temb_ref = rest[pos]
        pos += 1
    res_ref = rest[pos] if has_res else None

    cout = o_ref.shape[-1]
    total = Ho * W_acc
    first = True
    for x_ref, w_ref in zip(x_refs, w_refs):
        kh, kw = w_ref.shape[0], w_ref.shape[1]
        cin = x_ref.shape[-1]
        for ky in range(kh):
            if use_roll:
                # contiguous row slab, padded width -> relayout-free reshape (W_acc % 8 == 0)
                xrow = x_ref[0, ky:ky + Ho, :, :].reshape(total, cin)
            for kx in range(kw):
                if use_roll:
                    partial = jnp.dot(xrow, w_ref[ky, kx],
                                      preferred_element_type=jnp.float32)
                    if kx:
                        # out[m] = partial[m + kx]  (wrap-around only lands in discarded pad)
                        partial = pltpu.roll(partial, shift=total - kx, axis=0)
                else:
                    xs = x_ref[0, ky:ky + Ho, kx:kx + Wo, :].reshape(Ho * Wo, cin)
                    partial = jnp.dot(xs, w_ref[ky, kx],
                                      preferred_element_type=jnp.float32)
                if first:
                    acc_ref[...] = partial          # init with first tap (no zeros pass)
                    first = False
                else:
                    acc_ref[...] += partial
    if use_roll:
        y = acc_ref[...].reshape(Ho, W_acc, cout)[:, :Wo, :]
    else:
        y = acc_ref[...].reshape(Ho, Wo, cout)
    y = y + bias_ref[...]
    if has_temb:
        y = y + temb_ref[...]                               # per-batch time embedding
    if has_res:
        y = y + res_ref[0].astype(jnp.float32)              # fused residual add
    o_ref[...] = y.reshape(1, Ho, Wo, cout).astype(o_ref.dtype)


def _conv_call(xs_list, ws_list, bias, Ho, Wo, W_acc, cout, temb=None, residual=None,
               out_dtype=jnp.bfloat16, use_roll=True):
    n_in = len(xs_list)
    B = xs_list[0].shape[0]
    has_temb = temb is not None
    has_res = residual is not None

    in_specs = []
    args = []
    for xp in xs_list:
        in_specs.append(pl.BlockSpec((1,) + xp.shape[1:], lambda i: (i, 0, 0, 0)))
        args.append(xp)
    for wp in ws_list:
        in_specs.append(pl.BlockSpec(wp.shape, lambda i: (0, 0, 0, 0)))
        args.append(wp)
    in_specs.append(pl.BlockSpec((1, cout), lambda i: (0, 0)))
    args.append(bias.astype(jnp.float32).reshape(1, cout))
    if has_temb:
        in_specs.append(pl.BlockSpec((1, 1, cout), lambda i: (i, 0, 0)))
        args.append(temb.astype(jnp.float32).reshape(B, 1, cout))
    if has_res:
        in_specs.append(pl.BlockSpec((1, Ho, Wo, cout), lambda i: (i, 0, 0, 0)))
        args.append(residual)

    acc_w = W_acc if use_roll else Wo
    kernel = functools.partial(_conv_nhwc_kernel, n_in=n_in, has_temb=has_temb,
                               has_res=has_res, Ho=Ho, Wo=Wo, W_acc=W_acc,
                               use_roll=use_roll)
    # TODO(synk): spatial row tiling (2nd "parallel" grid axis) for the real 64x64 / v7x config.
    return pl.pallas_call(
        kernel,
        out_shape=jax.ShapeDtypeStruct((B, Ho, Wo, cout), out_dtype),
        grid_spec=pltpu.PrefetchScalarGridSpec(
            num_scalar_prefetch=0,
            grid=(B,),
            in_specs=in_specs,
            out_specs=pl.BlockSpec((1, Ho, Wo, cout), lambda i: (i, 0, 0, 0)),
            scratch_shapes=[pltpu.VMEM((Ho * acc_w, cout), jnp.float32)],
        ),
        compiler_params=pltpu.CompilerParams(
            dimension_semantics=("parallel",),
            vmem_limit_bytes=_VMEM_LIMIT_BYTES),
    )(*args)


def _conv2d_impl(x, p, stride=1, temb=None, residual=None,
                 out_dtype=jnp.bfloat16, use_roll=True):
    """NHWC conv with torch OIHW weights; padding = k//2 (diffusers uses padding=1 for both
    stride-1 and stride-2 3x3 convs). Optional fused per-batch temb add and residual add."""
    w, bias = p["w"], p["b"]
    cout, cin, kh, kw = w.shape
    B, H, W, C = x.shape
    assert C == cin
    pad = kh // 2
    xb = x.astype(jnp.bfloat16)                                  # halve HBM read traffic
    wf = jnp.transpose(w, (2, 3, 1, 0)).astype(jnp.bfloat16)     # [kh, kw, Cin, Cout]

    if stride == 1:
        Ho, Wo = H, W
        Win = W + 2 * pad
        W_acc = _round_up(Win, 8)
        xp = jnp.pad(xb, ((0, 0), (pad, pad), (pad, W_acc - W - pad), (0, 0)))
        xs_list, ws_list = [xp], [wf]
    elif stride == 2:
        Hp, Wp = H + 2 * pad, W + 2 * pad
        assert Hp % 2 == 0 and Wp % 2 == 0
        Ho, Wo = (Hp - kh) // 2 + 1, (Wp - kw) // 2 + 1
        xpad = jnp.pad(xb, ((0, 0), (pad, pad), (pad, pad), (0, 0)))
        Wph = Wp // 2
        W_acc = _round_up(Wph, 8)
        # Polyphase decomposition: stride-2 conv == sum of 4 stride-1 convs on the 4 input
        # phases with the matching weight sub-kernels.
        # TODO(synk): read the phases inside the kernel with strided slices instead of
        #             materializing 4 phase arrays in HBM.
        xs_list, ws_list = [], []
        for a in range(2):
            for b in range(2):
                ph = xpad[:, a::2, b::2, :]
                ph = jnp.pad(ph, ((0, 0), (0, 0), (0, W_acc - Wph), (0, 0)))
                xs_list.append(ph)
                ws_list.append(wf[a::2, b::2])
    else:
        raise NotImplementedError(stride)

    return _conv_call(xs_list, ws_list, bias, Ho, Wo, W_acc, cout, temb=temb,
                      residual=residual, out_dtype=out_dtype, use_roll=use_roll)


_CONV_USE_ROLL = None


def _conv_use_roll():
    """One-time numeric self-check of the roll-based tap loop against lax.conv;
    falls back to the window-slice path if it fails to lower or mismatches."""
    global _CONV_USE_ROLL
    if _CONV_USE_ROLL is None:
        try:
            kx = jax.random.PRNGKey(123)
            kw_ = jax.random.PRNGKey(7)
            x = jax.random.normal(kx, (1, 8, 9, 16), jnp.float32)                 # NHWC
            w = 0.1 * jax.random.normal(kw_, (16, 16, 3, 3), jnp.float32)         # OIHW
            b = jnp.zeros((16,), jnp.float32)
            got = _conv2d_impl(x, {"w": w, "b": b}, stride=1,
                               out_dtype=jnp.float32, use_roll=True)
            ref = jax.lax.conv_general_dilated(
                x, jnp.transpose(w, (2, 3, 1, 0)), (1, 1), "SAME",
                dimension_numbers=("NHWC", "HWIO", "NHWC")) + b
            _CONV_USE_ROLL = bool(jnp.allclose(got, ref, atol=0.1, rtol=0.05))
        except Exception:
            _CONV_USE_ROLL = False
    return _CONV_USE_ROLL


def conv2d(x, p, stride=1, temb=None, residual=None, out_dtype=jnp.bfloat16):
    return _conv2d_impl(x, p, stride=stride, temb=temb, residual=residual,
                        out_dtype=out_dtype, use_roll=_conv_use_roll())


# ----------------------------------------------------------------------------- group norm kernel
def _group_norm_kernel(x_ref, gamma_ref, beta_ref, gmat_ref, gmat_t_ref, o_ref, *,
                       eps, silu, group_size):
    _, H, W, C = x_ref.shape
    x = x_ref[...].astype(jnp.float32).reshape(H * W, C)
    gm = gmat_ref[...]        # [C, G] one-hot group membership
    gmt = gmat_t_ref[...]     # [G, C]
    ch_sum = jnp.sum(x, axis=0, keepdims=True)             # [1, C]
    ch_sq = jnp.sum(x * x, axis=0, keepdims=True)          # [1, C]
    g_sum = jnp.dot(ch_sum, gm, preferred_element_type=jnp.float32)   # [1, G]
    g_sq = jnp.dot(ch_sq, gm, preferred_element_type=jnp.float32)     # [1, G]
    mean_g = g_sum / group_size
    var_g = jnp.maximum(g_sq / group_size - mean_g * mean_g, 0.0)
    inv_g = jax.lax.rsqrt(var_g + eps)
    mean_c = jnp.dot(mean_g, gmt, preferred_element_type=jnp.float32)  # [1, C]
    inv_c = jnp.dot(inv_g, gmt, preferred_element_type=jnp.float32)    # [1, C]
    y = (x - mean_c) * inv_c * gamma_ref[...] + beta_ref[...]
    if silu:
        y = y * jax.nn.sigmoid(y)
    o_ref[...] = y.reshape(1, H, W, C).astype(o_ref.dtype)


def group_norm(x, gamma, beta, groups, *, silu=False, eps=1e-5):
    """torch.nn.GroupNorm over NHWC input, optional fused SiLU; bf16 in/out, f32 math."""
    # TODO(synk): whole-image block per batch; the real 64x64 config on v7x (64 MiB VMEM) needs
    #             a spatially tiled two-pass variant with a second parallel grid axis.
    B, H, W, C = x.shape
    cg = C // groups
    gmat = (jnp.arange(C)[:, None] // cg ==
            jnp.arange(groups)[None, :]).astype(jnp.float32)       # [C, G]
    kernel = functools.partial(_group_norm_kernel, eps=eps, silu=silu,
                               group_size=float(H * W * cg))
    return pl.pallas_call(
        kernel,
        out_shape=jax.ShapeDtypeStruct((B, H, W, C), jnp.bfloat16),
        grid_spec=pltpu.PrefetchScalarGridSpec(
            num_scalar_prefetch=0,
            grid=(B,),
            in_specs=[
                pl.BlockSpec((1, H, W, C), lambda i: (i, 0, 0, 0)),
                pl.BlockSpec((1, C), lambda i: (0, 0)),
                pl.BlockSpec((1, C), lambda i: (0, 0)),
                pl.BlockSpec((C, groups), lambda i: (0, 0)),
                pl.BlockSpec((groups, C), lambda i: (0, 0)),
            ],
            out_specs=pl.BlockSpec((1, H, W, C), lambda i: (i, 0, 0, 0)),
        ),
        compiler_params=pltpu.CompilerParams(
            dimension_semantics=("parallel",),
            vmem_limit_bytes=_VMEM_LIMIT_BYTES),
    )(x.astype(jnp.bfloat16), gamma.astype(jnp.float32).reshape(1, C),
      beta.astype(jnp.float32).reshape(1, C), gmat, gmat.T)


# ----------------------------------------------------------------------------- attention kernel
def _attention_kernel(qkv_ref, wo_ref, bo_ref, res_ref, o_ref, acc_ref, *,
                      heads, head_dim, scale, valid_t):
    """One (batch, head) per grid step; fused out-projection accumulated in VMEM + residual."""
    h = pl.program_id(1)
    Tp = qkv_ref.shape[2]
    C = o_ref.shape[-1]
    qkv = qkv_ref[0, 0]                                   # [Tp, 3*head_dim] bf16
    q = qkv[:, :head_dim]
    k = qkv[:, head_dim:2 * head_dim]
    v = qkv[:, 2 * head_dim:]
    s = jax.lax.dot_general(q, k, (((1,), (1,)), ((), ())),
                            preferred_element_type=jnp.float32) * scale
    col = jax.lax.broadcasted_iota(jnp.int32, (Tp, Tp), 1)
    s = jnp.where(col < valid_t, s, -1e30)                # mask padded keys
    s = s - jnp.max(s, axis=-1, keepdims=True)
    p = jnp.exp(s)
    p = p * pl.reciprocal(jnp.sum(p, axis=-1, keepdims=True), approx=True)
    o_h = jnp.dot(p.astype(jnp.bfloat16), v, preferred_element_type=jnp.float32)
    # concat(heads) @ Wout == sum_h o_h @ Wout[h*d:(h+1)*d, :]  (fused out projection)
    proj_h = jnp.dot(o_h.astype(jnp.bfloat16), wo_ref[0],
                     preferred_element_type=jnp.float32)  # [Tp, C]

    @pl.when(h == 0)
    def _init():
        acc_ref[...] = jnp.zeros_like(acc_ref)

    acc_ref[...] += proj_h

    @pl.when(h == heads - 1)
    def _finalize():
        y = acc_ref[...] + bo_ref[...] + res_ref[0].astype(jnp.float32)
        o_ref[...] = y.reshape(1, Tp, C).astype(o_ref.dtype)


def attention_block(x, p, groups, head_dim, eps):
    B, H, W, C = x.shape
    T = H * W
    heads = C // head_dim
    hn = group_norm(x, p["norm"]["g"], p["norm"]["b"], groups, silu=False, eps=eps)
    hs = hn.reshape(B * T, C)

    # Fused q/k/v projection with per-head-contiguous columns [q_h | k_h | v_h] so the heads
    # axis can become a grid dimension.
    wq = p["q"]["w"].reshape(C, heads, head_dim)
    wk = p["k"]["w"].reshape(C, heads, head_dim)
    wv = p["v"]["w"].reshape(C, heads, head_dim)
    wqkv = jnp.concatenate([wq, wk, wv], axis=2).reshape(C, 3 * C)
    bq = p["q"]["b"].reshape(heads, head_dim)
    bk = p["k"]["b"].reshape(heads, head_dim)
    bv = p["v"]["b"].reshape(heads, head_dim)
    bqkv = jnp.concatenate([bq, bk, bv], axis=1).reshape(3 * C)

    qkv = pallas_matmul(hs, wqkv, bqkv, out_dtype=jnp.bfloat16)          # [B*T, 3C] bf16
    qkv = qkv.reshape(B, T, heads, 3 * head_dim).transpose(0, 2, 1, 3)   # [B, heads, T, 3d]

    Tp = max(8, _round_up(T, 8))
    if Tp != T:
        qkv = jnp.pad(qkv, ((0, 0), (0, 0), (0, Tp - T), (0, 0)))
    res = x.reshape(B, T, C)
    res_p = jnp.pad(res, ((0, 0), (0, Tp - T), (0, 0))) if Tp != T else res

    wo = p["out"]["w"].reshape(heads, head_dim, C).astype(jnp.bfloat16)  # per-head row blocks
    bo = p["out"]["b"].astype(jnp.float32).reshape(1, C)

    kernel = functools.partial(_attention_kernel, heads=heads, head_dim=head_dim,
                               scale=1.0 / math.sqrt(head_dim), valid_t=T)
    out = pl.pallas_call(
        kernel,
        out_shape=jax.ShapeDtypeStruct((B, Tp, C), jnp.bfloat16),
        grid_spec=pltpu.PrefetchScalarGridSpec(
            num_scalar_prefetch=0,
            grid=(B, heads),
            in_specs=[
                pl.BlockSpec((1, 1, Tp, 3 * head_dim), lambda b, h: (b, h, 0, 0)),
                pl.BlockSpec((1, head_dim, C), lambda b, h: (h, 0, 0)),
                pl.BlockSpec((1, C), lambda b, h: (0, 0)),
                pl.BlockSpec((1, Tp, C), lambda b, h: (b, 0, 0)),
            ],
            out_specs=pl.BlockSpec((1, Tp, C), lambda b, h: (b, 0, 0)),
            scratch_shapes=[pltpu.VMEM((Tp, C), jnp.float32)],
        ),
        compiler_params=pltpu.CompilerParams(
            dimension_semantics=("parallel", "arbitrary"),
            vmem_limit_bytes=_VMEM_LIMIT_BYTES),
    )(qkv, wo, bo, res_p)
    return out[:, :T, :].reshape(B, H, W, C)


# ----------------------------------------------------------------------------- UNet building blocks
def resnet_block(x, emb_act, p, groups, eps):
    h = group_norm(x, p["norm1"]["g"], p["norm1"]["b"], groups, silu=True, eps=eps)
    temb = pallas_matmul(emb_act, p["time_proj"]["w"], p["time_proj"]["b"])   # [B, Cout] f32
    h = conv2d(h, p["conv1"], stride=1, temb=temb)       # conv1 + bias + temb fused
    h = group_norm(h, p["norm2"]["g"], p["norm2"]["b"], groups, silu=True, eps=eps)
    # TODO(synk): dropout is identity in eval mode; omitted.
    res = conv2d(x, p["shortcut"], stride=1) if "shortcut" in p else x   # 1x1 conv shortcut
    return conv2d(h, p["conv2"], stride=1, residual=res)  # conv2 + bias + residual fused


def timestep_embedding(t, dim):
    # diffusers Timesteps(dim, flip_sin_to_cos=True, downscale_freq_shift=0)
    half = dim // 2
    exponent = -math.log(10000.0) * jnp.arange(half, dtype=jnp.float32) / half
    freqs = jnp.exp(exponent)
    args = t.astype(jnp.float32)[:, None] * freqs[None, :]
    emb = jnp.concatenate([jnp.sin(args), jnp.cos(args)], axis=-1)
    emb = jnp.concatenate([emb[:, half:], emb[:, :half]], axis=-1)  # flip_sin_to_cos
    return emb


# ----------------------------------------------------------------------------- parameter init
class _KeyGen:
    def __init__(self, key):
        self._key = key

    def __call__(self):
        self._key, sub = jax.random.split(self._key)
        return sub


def _init_linear(kg, d_in, d_out, scale=0.05):
    # stored as [in, out] (transpose of torch.nn.Linear's [out, in]) for direct matmul.
    return {"w": scale * jax.random.normal(kg(), (d_in, d_out), jnp.float32),
            "b": scale * jax.random.normal(kg(), (d_out,), jnp.float32)}


def _init_conv(kg, c_in, c_out, ksize, scale=0.05):
    # torch Conv2d OIHW layout.
    return {"w": scale * jax.random.normal(kg(), (c_out, c_in, ksize, ksize), jnp.float32),
            "b": scale * jax.random.normal(kg(), (c_out,), jnp.float32)}


def _init_group_norm(c):
    return {"g": jnp.ones((c,), jnp.float32), "b": jnp.zeros((c,), jnp.float32)}


def _init_resnet(kg, c_in, c_out, temb_dim):
    p = {"norm1": _init_group_norm(c_in),
         "conv1": _init_conv(kg, c_in, c_out, 3),
         "time_proj": _init_linear(kg, temb_dim, c_out),
         "norm2": _init_group_norm(c_out),
         "conv2": _init_conv(kg, c_out, c_out, 3)}
    if c_in != c_out:
        p["shortcut"] = _init_conv(kg, c_in, c_out, 1)
    return p


def _init_attention(kg, c):
    return {"norm": _init_group_norm(c),
            "q": _init_linear(kg, c, c),
            "k": _init_linear(kg, c, c),
            "v": _init_linear(kg, c, c),
            "out": _init_linear(kg, c, c)}


def init_unet_params(key, cfg):
    kg = _KeyGen(key)
    boc = cfg["block_out_channels"]
    temb_dim = boc[0] * 4          # == embed_size of the custom class-embedding Linear
    lpb = cfg["layers_per_block"]
    n_blocks = len(boc)
    p = {}
    p["conv_in"] = _init_conv(kg, cfg["in_channels"], boc[0], 3)
    p["time_mlp1"] = _init_linear(kg, boc[0], temb_dim)
    p["time_mlp2"] = _init_linear(kg, temb_dim, temb_dim)
    # self.model.class_embedding = nn.Linear(num_class, embed_size)
    p["class_emb"] = _init_linear(kg, cfg["num_class"], temb_dim)

    down = []
    out_ch = boc[0]
    for i, btype in enumerate(cfg["down_block_types"]):
        in_ch, out_ch = out_ch, boc[i]
        is_final = i == n_blocks - 1
        blk = {"resnets": [], "attentions": [], "downsample": None}
        for j in range(lpb):
            blk["resnets"].append(_init_resnet(kg, in_ch if j == 0 else out_ch, out_ch, temb_dim))
            if btype == "AttnDownBlock2D":
                blk["attentions"].append(_init_attention(kg, out_ch))
        if not is_final:
            blk["downsample"] = _init_conv(kg, out_ch, out_ch, 3)   # stride-2 conv
        down.append(blk)
    p["down_blocks"] = down

    p["mid_block"] = {"resnet1": _init_resnet(kg, boc[-1], boc[-1], temb_dim),
                      "attention": _init_attention(kg, boc[-1]),
                      "resnet2": _init_resnet(kg, boc[-1], boc[-1], temb_dim)}

    up = []
    rev = list(reversed(boc))
    prev_out = rev[0]
    for i, btype in enumerate(cfg["up_block_types"]):
        out_c = rev[i]
        in_c = rev[min(i + 1, n_blocks - 1)]
        is_final = i == n_blocks - 1
        blk = {"resnets": [], "attentions": [], "upsample": None}
        for j in range(lpb + 1):
            skip_c = in_c if j == lpb else out_c
            r_in = prev_out if j == 0 else out_c
            blk["resnets"].append(_init_resnet(kg, r_in + skip_c, out_c, temb_dim))
            if btype == "AttnUpBlock2D":
                blk["attentions"].append(_init_attention(kg, out_c))
        if not is_final:
            blk["upsample"] = _init_conv(kg, out_c, out_c, 3)
        up.append(blk)
        prev_out = out_c
    p["up_blocks"] = up

    p["norm_out"] = _init_group_norm(boc[0])
    p["conv_out"] = _init_conv(kg, boc[0], cfg["out_channels"], 3)
    return p


# ----------------------------------------------------------------------------- full forward
def conditioned_unet_forward(params, x_nchw, t, y, cfg):
    """Mirrors ConditionedUNet.forward(x, t, y) -> self.model(x, t, class_labels=y).sample."""
    boc = cfg["block_out_channels"]
    groups = cfg["norm_num_groups"]
    eps = cfg["norm_eps"]
    head_dim = cfg["attention_head_dim"]
    lpb = cfg["layers_per_block"]

    B = x_nchw.shape[0]
    x = jnp.transpose(x_nchw.astype(jnp.float32), (0, 2, 3, 1))    # NCHW -> NHWC

    # time + class conditioning
    t = jnp.broadcast_to(jnp.asarray(t, jnp.float32).reshape(-1), (B,))
    t_emb = timestep_embedding(t, boc[0])
    emb = pallas_matmul(t_emb, params["time_mlp1"]["w"], params["time_mlp1"]["b"],
                        activation="silu")
    emb = pallas_matmul(emb, params["time_mlp2"]["w"], params["time_mlp2"]["b"])
    class_emb = pallas_matmul(y.astype(jnp.float32),
                              params["class_emb"]["w"], params["class_emb"]["b"])
    emb = emb + class_emb
    emb_act = _silu(emb)          # SiLU(emb) consumed by every resnet time projection

    # conv_in
    h = conv2d(x, params["conv_in"], stride=1)
    skips = [h]

    # down path
    for i, blk in enumerate(params["down_blocks"]):
        btype = cfg["down_block_types"][i]
        for j in range(lpb):
            h = resnet_block(h, emb_act, blk["resnets"][j], groups, eps)
            if btype == "AttnDownBlock2D":
                h = attention_block(h, blk["attentions"][j], groups, head_dim, eps)
            skips.append(h)
        if blk["downsample"] is not None:
            h = conv2d(h, blk["downsample"], stride=2)
            skips.append(h)

    # mid block
    mid = params["mid_block"]
    h = resnet_block(h, emb_act, mid["resnet1"], groups, eps)
    h = attention_block(h, mid["attention"], groups, head_dim, eps)
    h = resnet_block(h, emb_act, mid["resnet2"], groups, eps)

    # up path
    for i, blk in enumerate(params["up_blocks"]):
        btype = cfg["up_block_types"][i]
        n_res = lpb + 1
        res_samples, skips = skips[-n_res:], skips[:-n_res]
        for j in range(n_res):
            # TODO(synk): skip concat still materialized in HBM (bf16 now); eliminating it
            #             needs 2-input group-norm + split-K conv variants.
            h = jnp.concatenate([h, res_samples[-(j + 1)]], axis=-1)
            h = resnet_block(h, emb_act, blk["resnets"][j], groups, eps)
            if btype == "AttnUpBlock2D":
                h = attention_block(h, blk["attentions"][j], groups, head_dim, eps)
        if blk["upsample"] is not None:
            # TODO(synk): nearest-2x upsample kept in JAX (bf16); could be folded into the
            #             following conv's input indexing to avoid the 4x intermediate.
            h = jnp.repeat(jnp.repeat(h, 2, axis=1), 2, axis=2)
            h = conv2d(h, blk["upsample"], stride=1)

    # output head: GroupNorm -> SiLU -> conv_out (f32 output like the torch module)
    h = group_norm(h, params["norm_out"]["g"], params["norm_out"]["b"],
                   groups, silu=True, eps=eps)
    h = conv2d(h, params["conv_out"], stride=1, out_dtype=jnp.float32)
    return jnp.transpose(h, (0, 3, 1, 2))        # back to NCHW, like `.sample`


# ----------------------------------------------------------------------------- demo
if __name__ == "__main__":
    cfg = CONFIG
    key = jax.random.PRNGKey(0)
    k_params, k_x, k_y = jax.random.split(key, 3)

    params = init_unet_params(k_params, cfg)

    B = 2
    S = cfg["sample_size"]
    x = jax.random.normal(k_x, (B, cfg["in_channels"], S, S), jnp.float32)   # NCHW like torch
    t = jnp.array([10.0, 500.0], jnp.float32)                                # timesteps
    labels = jax.random.randint(k_y, (B,), 0, cfg["num_class"])
    y = jax.nn.one_hot(labels, cfg["num_class"], dtype=jnp.float32)          # [B, num_class]

    out = conditioned_unet_forward(params, x, t, y, cfg)
    out = jax.block_until_ready(out)

    assert out.shape == (B, cfg["out_channels"], S, S), out.shape
    assert bool(jnp.all(jnp.isfinite(out)))
    print("KERNEL_OK")
</pallas_src>

<mosaic_0001>
module attributes {stable_mosaic.version = 11 : i64} {
  func.func @_matmul_bias_kernel(%arg0: i32, %arg1: i32, %arg2: i32, %arg3: memref<8x128xbf16, #tpu.memory_space<vmem>>, %arg4: memref<128x128xbf16, #tpu.memory_space<vmem>>, %arg5: memref<1x128xf32, #tpu.memory_space<vmem>>, %arg6: memref<8x128xf32, #tpu.memory_space<vmem>>, %arg7: memref<8x128xf32, #tpu.memory_space<vmem>>) attributes {dimension_semantics = [#tpu.dimension_semantics<parallel>, #tpu.dimension_semantics<parallel>, #tpu.dimension_semantics<arbitrary>], iteration_bounds = array<i64: 1, 1, 1>, scalar_prefetch = 0 : i64, scratch_operands = 1 : i64, tpu.core_type = #tpu.core_type<tc>, window_params = [{transform_indices = @transform_0, window_bounds = array<i64: 8, 128>}, {transform_indices = @transform_1, window_bounds = array<i64: 128, 128>}, {transform_indices = @transform_2, window_bounds = array<i64: 1, 128>}, {transform_indices = @transform_3, window_bounds = array<i64: 8, 128>}]} {
    %c0_i32 = arith.constant 0 : i32
    %0 = arith.cmpi eq, %arg2, %c0_i32 : i32
    %1 = arith.extui %0 : i1 to i32
    %c0_i32_0 = arith.constant 0 : i32
    %2 = arith.cmpi ne, %1, %c0_i32_0 : i32
    scf.if %2 {
      %cst_10 = arith.constant 0.000000e+00 : f32
      %12 = vector.broadcast %cst_10 : f32 to vector<8x128xf32>
      %c0_11 = arith.constant 0 : index
      %c0_12 = arith.constant 0 : index
      %13 = vector.load %arg7[%c0_11, %c0_12] : memref<8x128xf32, #tpu.memory_space<vmem>>, vector<8x128xf32>
      tpu.vector_store %arg7[%c0_11, %c0_12], %12 {strides = array<i32>} : memref<8x128xf32, #tpu.memory_space<vmem>>, vector<8x128xf32>,
    } else {
    }
    %c0 = arith.constant 0 : index
    %c0_1 = arith.constant 0 : index
    %3 = vector.load %arg7[%c0, %c0_1] : memref<8x128xf32, #tpu.memory_space<vmem>>, vector<8x128xf32>
    %c0_2 = arith.constant 0 : index
    %c0_3 = arith.constant 0 : index
    %4 = vector.load %arg3[%c0_2, %c0_3] : memref<8x128xbf16, #tpu.memory_space<vmem>>, vector<8x128xbf16>
    %c0_4 = arith.constant 0 : index
    %c0_5 = arith.constant 0 : index
    %5 = vector.load %arg4[%c0_4, %c0_5] : memref<128x128xbf16, #tpu.memory_space<vmem>>, vector<128x128xbf16>
    %cst = arith.constant dense<0.000000e+00> : vector<8x128xf32>
    %6 = tpu.matmul %4, %5, %cst {dimension_numbers = #tpu.dot_dimension_numbers<[1], [0], [0], [1], [0, 0, 1, 1], [], []>} : vector<8x128xbf16>, vector<128x128xbf16>, vector<8x128xf32> -> vector<8x128xf32>
    %7 = arith.addf %3, %6 : vector<8x128xf32>
    %c0_6 = arith.constant 0 : index
    %c0_7 = arith.constant 0 : index
    %8 = vector.load %arg7[%c0_6, %c0_7] : memref<8x128xf32, #tpu.memory_space<vmem>>, vector<8x128xf32>
    tpu.vector_store %arg7[%c0_6, %c0_7], %7 {strides = array<i32>} : memref<8x128xf32, #tpu.memory_space<vmem>>, vector<8x128xf32>,
    %c0_i32_8 = arith.constant 0 : i32
    %9 = arith.cmpi eq, %arg2, %c0_i32_8 : i32
    %10 = arith.extui %9 : i1 to i32
    %c0_i32_9 = arith.constant 0 : i32
    %11 = arith.cmpi ne, %10, %c0_i32_9 : i32
    scf.if %11 {
      %c0_10 = arith.constant 0 : index
      %c0_11 = arith.constant 0 : index
      %12 = vector.load %arg7[%c0_10, %c0_11] : memref<8x128xf32, #tpu.memory_space<vmem>>, vector<8x128xf32>
      %c0_12 = arith.constant 0 : index
      %c0_13 = arith.constant 0 : index
      %13 = vector.load %arg5[%c0_12, %c0_13] : memref<1x128xf32, #tpu.memory_space<vmem>>, vector<1x128xf32>
      %14 = vector.broadcast %13 : vector<1x128xf32> to vector<8x128xf32>
      %15 = arith.addf %12, %14 : vector<8x128xf32>
      %16 = arith.negf %15 : vector<8x128xf32>
      %17 = math.exp %16 : vector<8x128xf32>
      %cst_14 = arith.constant 1.000000e+00 : f32
      %18 = vector.broadcast %cst_14 : f32 to vector<8x128xf32>
      %19 = arith.addf %18, %17 : vector<8x128xf32>
      %20 = arith.divf %18, %19 : vector<8x128xf32>
      %21 = arith.mulf %15, %20 : vector<8x128xf32>
      %c0_15 = arith.constant 0 : index
      %c0_16 = arith.constant 0 : index
      %22 = vector.load %arg6[%c0_15, %c0_16] : memref<8x128xf32, #tpu.memory_space<vmem>>, vector<8x128xf32>
      tpu.vector_store %arg6[%c0_15, %c0_16], %21 {strides = array<i32>} : memref<8x128xf32, #tpu.memory_space<vmem>>, vector<8x128xf32>,
    } else {
    }
    return
  }
  func.func @transform_0(%arg0: i32, %arg1: i32, %arg2: i32) -> (i32, i32) {
    %c0_i32 = arith.constant 0 : i32
    return %arg0, %arg2 : i32, i32
  }
  func.func @transform_1(%arg0: i32, %arg1: i32, %arg2: i32) -> (i32, i32) {
    %c0_i32 = arith.constant 0 : i32
    return %arg2, %arg1 : i32, i32
  }
  func.func @transform_2(%arg0: i32, %arg1: i32, %arg2: i32) -> (i32, i32) {
    %c0_i32 = arith.constant 0 : i32
    %c0_i32_0 = arith.constant 0 : i32
    return %c0_i32, %arg1 : i32, i32
  }
  func.func @transform_3(%arg0: i32, %arg1: i32, %arg2: i32) -> (i32, i32) {
    %c0_i32 = arith.constant 0 : i32
    return %arg0, %arg1 : i32, i32
  }
}

</mosaic_0001>

<llo_original>
// kernel: tpu_custom_call.1
$region0: #{tpu_custom_call.1}
  #allocation0 [shape = 'u32[]', space=smem, size = 0x4, offset = 0x4, fixed_abs, tag = 'smem constant byte address 0x4 - core index']
  #allocation1 [shape = 'u32[144,128]{1,0:T(1,128)}', space=vmem, size = 0x12000, scoped, tag = 'internal scratch']
  #allocation2 [shape = 'f32[8,128]{1,0:T(8,128)}', space=vmem, size = 0x1000, scoped, tag = 'scratch operand']
  %s0 = inlined_call_operand.hbm [shape: bf16[8,128], index: 0, kind: input, shape index: {}]
  %s1 = inlined_call_operand.hbm [shape: bf16[128,128], index: 1, kind: input, shape index: {}]
  %s2 = inlined_call_operand.vmem [shape: f32[1,128], index: 2, kind: input, shape index: {}]
  %s3 = inlined_call_operand.hbm [shape: f32[8,128], index: 3, kind: output, shape index: {}]
  %s4 = sld [smem:[#allocation0]]
  $region38: #{tpu_custom_call.1} parent=0
    _
  %s6 = ssub.s32 1, %s4
  %s7 = scalar_select 0, %s6, %s4
  $region1: #{tpu_custom_call.1} parent=0
    #allocation3 [shape = 'u8[2048]{0}', space=vmem, size = 0x800, scoped, tag = 'input window, operand 0, single buffered']
    #allocation4 [shape = 's32[1]{0}', space=sflag, size = 0x4, scoped, tag = 'scoped memory for tpu_custom_call.1']
    #allocation5 [shape = 's32[1]{0}', space=sflag, size = 0x4, scoped, tag = 'scoped memory for tpu_custom_call.1']
    #allocation6 [shape = 'u8[32768]{0}', space=vmem, size = 0x8000, scoped, tag = 'input window, operand 1, single buffered']
    #allocation7 [shape = 's32[1]{0}', space=sflag, size = 0x4, scoped, tag = 'scoped memory for tpu_custom_call.1']
    #allocation8 [shape = 'u8[4096]{0}', space=vmem, size = 0x1000, scoped, tag = 'output window, operand 0, single buffered']
    %8 = vsyncpa [#allocation4], 0
    %9 = vsyncpa [#allocation7], 0
    %10 = vsyncpa [#allocation5], 0
    // Predicated region
    $region2: #{tpu_custom_call.1} parent=1 // pred_check
      _
    $region3: #{tpu_custom_call.1} parent=1 // pred_check_branch
      %12 = sbr.rel (0) target = $region5
    $region4: #{tpu_custom_call.1} parent=1 // pred_region
      %s14 = ssub.s32 64, 64
      %15 = vsyncadd [#allocation4], %s14
      %s17 = sshll.u32 [#allocation3], 4
      %s18 = int_to_ptr.vmem [resolvable:$true] %s17
      %20 = dma.hbm_to_vmem [thread:$0]  %s0, 64, %s18, [#allocation4]
    $region5: #{tpu_custom_call.1} parent=1 // pred_fallthru
      _
    // Predicated region
    $region6: #{tpu_custom_call.1} parent=1 // pred_check
      _
    $region7: #{tpu_custom_call.1} parent=1 // pred_check_branch
      %22 = sbr.rel (0) target = $region9
    $region8: #{tpu_custom_call.1} parent=1 // pred_region
      %s24 = ssub.s32 1024, 1024
      %25 = vsyncadd [#allocation7], %s24
      %s26 = sshll.u32 [#allocation6], 4
      %s27 = int_to_ptr.vmem [resolvable:$true] %s26
      %32 = dma.hbm_to_vmem [thread:$0]  %s1, 1024, %s27, [#allocation7], 64, 64, 4
    $region9: #{tpu_custom_call.1} parent=1 // pred_fallthru
      _
    // Predicated region
    $region10: #{tpu_custom_call.1} parent=1 // pred_check
      _
    $region11: #{tpu_custom_call.1} parent=1 // pred_check_branch
      %34 = sbr.rel (0) target = $region13
    $region12: #{tpu_custom_call.1} parent=1 // pred_region
      _
    $region13: #{tpu_custom_call.1} parent=1 // pred_fallthru
      _
    // Predicated region
    $region14: #{tpu_custom_call.1} parent=1 // pred_check
      _
    $region15: #{tpu_custom_call.1} parent=1 // pred_check_branch
      %36 = sbr.rel (0) target = $region17
    $region16: #{tpu_custom_call.1} parent=1 // pred_region
      %37 = dma.done [#allocation4], 64
    $region17: #{tpu_custom_call.1} parent=1 // pred_fallthru
      _
    // Predicated region
    $region18: #{tpu_custom_call.1} parent=1 // pred_check
      _
    $region19: #{tpu_custom_call.1} parent=1 // pred_check_branch
      %39 = sbr.rel (0) target = $region21
    $region20: #{tpu_custom_call.1} parent=1 // pred_region
      %40 = dma.done [#allocation7], 1024
    $region21: #{tpu_custom_call.1} parent=1 // pred_fallthru
      _
    %p42 = scmp.eq.s32.totalorder 0, 0
    // Predicated region
    $region22: #{tpu_custom_call.1} parent=1 // pred_check
      %p43 = pneg %p42
    $region23: #{tpu_custom_call.1} parent=1 // pred_check_branch
      %45 = sbr.rel (%p43) target = $region25
    $region24: #{tpu_custom_call.1} parent=1 // pred_region
      %46 = vst [vmem:[#allocation2] sm:$0xff] 0.0
    $region25: #{tpu_custom_call.1} parent=1 // pred_fallthru
      _
    %v47 = vld [vmem:[#allocation2] sm:$0xff]
    %v48 = vld [vmem:[#allocation3] sm:$0xf]
    %v49 = vld [vmem:[#allocation6] sm:$0xf]
    %v50 = vld [vmem:[#allocation6 + $0x4] sm:$0xf]
    %v51 = vld [vmem:[#allocation6 + $0x8] sm:$0xf]
    %v52 = vld [vmem:[#allocation6 + $0xc] sm:$0xf]
    %v53 = vld [vmem:[#allocation6 + $0x10] sm:$0xf]
    %v54 = vld [vmem:[#allocation6 + $0x14] sm:$0xf]
    %v55 = vld [vmem:[#allocation6 + $0x18] sm:$0xf]
    %v56 = vld [vmem:[#allocation6 + $0x1c] sm:$0xf]
    %v57 = vld [vmem:[#allocation6 + $0x20] sm:$0xf]
    %v58 = vld [vmem:[#allocation6 + $0x24] sm:$0xf]
    %v59 = vld [vmem:[#allocation6 + $0x28] sm:$0xf]
    %v60 = vld [vmem:[#allocation6 + $0x2c] sm:$0xf]
    %v61 = vld [vmem:[#allocation6 + $0x30] sm:$0xf]
    %v62 = vld [vmem:[#allocation6 + $0x34] sm:$0xf]
    %v63 = vld [vmem:[#allocation6 + $0x38] sm:$0xf]
    %v64 = vld [vmem:[#allocation6 + $0x3c] sm:$0xf]
    %v81 = vunpack.c.l.b16 %v49
    %v82 = vunpack.c.l.b16 %v50
    %v83 = vunpack.c.l.b16 %v51
    %v84 = vunpack.c.l.b16 %v52
    %v85 = vunpack.c.l.b16 %v53
    %v86 = vunpack.c.l.b16 %v54
    %v87 = vunpack.c.l.b16 %v55
    %v88 = vunpack.c.l.b16 %v56
    %v89 = vunpack.c.l.b16 %v57
    %v90 = vunpack.c.l.b16 %v58
    %v91 = vunpack.c.l.b16 %v59
    %v92 = vunpack.c.l.b16 %v60
    %v93 = vunpack.c.l.b16 %v61
    %v94 = vunpack.c.l.b16 %v62
    %v95 = vunpack.c.l.b16 %v63
    %v96 = vunpack.c.l.b16 %v64
    %v97 = vpack.c.b16 %v82, %v81
    %v98 = vpack.c.b16 %v84, %v83
    %v99 = vpack.c.b16 %v86, %v85
    %v100 = vpack.c.b16 %v88, %v87
    %v101 = vpack.c.b16 %v90, %v89
    %v102 = vpack.c.b16 %v92, %v91
    %v103 = vpack.c.b16 %v94, %v93
    %v104 = vpack.c.b16 %v96, %v95
    %113 = vmatprep.subr.bf16.mxu0 0
    %114 = vmatpush1.bf16.msra.mxu0 %v104
    %115 = vmatprep.subr.bf16.mxu0 0
    %116 = vmatpush1.bf16.msra.mxu0 %v103
    %117 = vmatprep.subr.bf16.mxu0 0
    %118 = vmatpush1.bf16.msra.mxu0 %v102
    %119 = vmatprep.subr.bf16.mxu0 0
    %120 = vmatpush1.bf16.msra.mxu0 %v101
    %121 = vmatprep.subr.bf16.mxu0 0
    %122 = vmatpush1.bf16.msra.mxu0 %v100
    %123 = vmatprep.subr.bf16.mxu0 0
    %124 = vmatpush1.bf16.msra.mxu0 %v99
    %125 = vmatprep.subr.bf16.mxu0 0
    %126 = vmatpush1.bf16.msra.mxu0 %v98
    %127 = vmatprep.subr.bf16.mxu0 0
    %128 = vmatpush1.bf16.msra.mxu0 %v97
    %129 = vmatprep.subr.bf16.mxu0 0
    %130 = vmatpush2.bf16.msra.mxu0 0
    %131 = vmatprep.subr.bf16.mxu0 0
    %132 = vmatpush2.bf16.msra.mxu0 0
    %133 = vmatprep.subr.bf16.mxu0 0
    %134 = vmatpush2.bf16.msra.mxu0 0
    %135 = vmatprep.subr.bf16.mxu0 0
    %136 = vmatpush2.bf16.msra.mxu0 0
    %137 = vmatprep.subr.bf16.mxu0 0
    %138 = vmatpush2.bf16.msra.mxu0 0
    %139 = vmatprep.subr.bf16.mxu0 0
    %140 = vmatpush2.bf16.msra.mxu0 0
    %141 = vmatprep.subr.bf16.mxu0 0
    %142 = vmatpush2.bf16.msra.mxu0 0
    %143 = vmatprep.subr.bf16.mxu0 0
    %144 = vmatpush2.bf16.msra.mxu0 0
    %145 = vmatprep.mubr.bf16.mxu0 0
    %146 = vmatmul.mubr.bf16.gmra.mxu0 %v48
    %v147 = vpop.f32.mrf.mxu0
    %v148 = vadd.f32 0.0, %v147
    %v149 = vpop.f32.mrf.mxu0
    %v150 = vpop.f32.mrf.mxu0
    %v151 = vpop.f32.mrf.mxu0
    %152 = vdwg.mxu0
    %v153 = vadd.f32 %v47, %v148
    %154 = vst [vmem:[#allocation2] sm:$0xff] %v153
    // Predicated region
    $region26: #{tpu_custom_call.1} parent=1 // pred_check
      %p155 = pneg %p42
    $region27: #{tpu_custom_call.1} parent=1 // pred_check_branch
      %157 = sbr.rel (%p155) target = $region29
    $region28: #{tpu_custom_call.1} parent=1 // pred_region
      %v158 = vld [vmem:[#allocation2] sm:$0xff]
      %v159 = vld [vmem:[%s2] sm:$0x1]
      %v161 = vlaneseq
      %v162 = vshrl.u32 %v161, 7
      %v163 = vsub.s32 0, %v162
      %v164 = vrot.slane %v159, %v163
      %v166 = vadd.f32 %v158, %v164
      %v167 = vxor.u32 %v166, 2147483648
      %v168 = vmul.f32 %v167, 1.442695
      %v169 = vpow.pop %v168
      %v170 = vadd.f32 %v169, 1.0
      %v171 = vrcp.pop %v170
      %v172 = vmul.f32 1.0, %v171
      %v173 = vmul.f32 %v166, %v172
      %174 = vst [vmem:[#allocation8] sm:$0xff] %v173
    $region29: #{tpu_custom_call.1} parent=1 // pred_fallthru
      _
    // Predicated region
    $region30: #{tpu_custom_call.1} parent=1 // pred_check
      _
    $region31: #{tpu_custom_call.1} parent=1 // pred_check_branch
      %176 = sbr.rel (0) target = $region33
    $region32: #{tpu_custom_call.1} parent=1 // pred_region
      %s178 = ssub.s32 128, 128
      %179 = vsyncadd [#allocation5], %s178
      %s181 = sshll.u32 [#allocation8], 4
      %s182 = int_to_ptr.vmem [resolvable:$true] %s181
      %184 = dma.vmem_to_hbm [thread:$0]  %s182, 128, %s3, [#allocation5]
    $region33: #{tpu_custom_call.1} parent=1 // pred_fallthru
      _
    // Predicated region
    $region34: #{tpu_custom_call.1} parent=1 // pred_check
      _
    $region35: #{tpu_custom_call.1} parent=1 // pred_check_branch
      %186 = sbr.rel (0) target = $region37
    $region36: #{tpu_custom_call.1} parent=1 // pred_region
      %187 = dma.done [#allocation5], 128
    $region37: #{tpu_custom_call.1} parent=1 // pred_fallthru
      _
    %188 = vsyncpa [#allocation4], 1
    %189 = vsyncpa [#allocation7], 1
    %190 = vsyncpa [#allocation5], 1

</llo_original>
